<compile_context>
chip_gen: v7x
topology: tpu7x:2x2x1
jax: 0.10.0
libtpu: 0.0.40
codegen_flags: <defaults>
</compile_context>

<pallas_src>
import functools

import jax
import jax.numpy as jnp
from jax.experimental import pallas as pl
from jax.experimental.pallas import tpu as pltpu

BN_EPS = 1e-5
_SUBLANE = 8


def _round_up(x, m):
    return ((x + m - 1) // m) * m


def _vmem_capacity_bytes():
    try:
        return int(pltpu.get_tpu_info().vmem_capacity_bytes)
    except Exception:
        return 64 << 20  # conservative (v7x per-TensorCore figure)


def _pick_tile(n_rows, per_row_bytes, fixed_bytes, budget, cap):
    """Largest row-tile (multiple of 8, <= cap) whose footprint fits budget."""
    tile = min(cap, _round_up(max(n_rows, 1), _SUBLANE))
    tile = _round_up(tile, _SUBLANE)
    while tile > _SUBLANE and fixed_bytes + per_row_bytes * tile > budget:
        tile = _round_up(max(tile // 2, _SUBLANE), _SUBLANE)
    return tile


def _proj_stats_kernel(x_ref, w_ref, y_ref, stats_ref, *,
                       n_valid, tile_m, tiles_per_slice, mask_needed):
    # x_ref:     (TM, F)   f32 activation tile (F = factor * D)
    # w_ref:     (F, D)    bf16 projection weight (resident across the grid)
    # y_ref:     (TM, D)   bf16 projected output tile
    # stats_ref: (16, D)   f32 per-slice accumulator;
    #            rows 0-7 = sublane-partial sums, rows 8-15 = partial sumsq.
    i = pl.program_id(0)          # stats slice ("parallel"; one per TC on v7x)
    j = pl.program_id(1)          # row tile within the slice ("arbitrary")
    blk = i * tiles_per_slice + j  # un-clamped global row-block index

    @pl.when(j == 0)
    def _():
        stats_ref[...] = jnp.zeros_like(stats_ref)

    x = x_ref[...].astype(jnp.bfloat16)      # bf16 MXU path, f32 accumulate
    y = jnp.dot(x, w_ref[...], preferred_element_type=jnp.float32)
    y_ref[...] = y.astype(y_ref.dtype)       # bf16 intermediate to HBM

    def _accum(ym):
        # Sublane-partial statistics: VPU-only adds of (8, D) groups, no
        # cross-sublane XLU reduction in the hot loop.  Final 8->1 reduce is
        # done once in pass 2.
        s = ym[0:8, :]
        q = s * s
        for r in range(1, tile_m // 8):
            rows = ym[8 * r:8 * (r + 1), :]
            s = s + rows
            q = q + rows * rows
        stats_ref[0:8, :] += s
        stats_ref[8:16, :] += q

    if mask_needed:
        # Fast unmasked path for full tiles; only the partial / duplicated
        # trailing tile pays for the iota + select.
        full = (blk + 1) * tile_m <= n_valid

        @pl.when(full)
        def _():
            _accum(y)

        @pl.when(jnp.logical_not(full))
        def _():
            row = blk * tile_m + jax.lax.broadcasted_iota(
                jnp.int32, (tile_m, 1), 0)
            _accum(jnp.where(row < n_valid, y, 0.0))
    else:
        _accum(y)


def _bn_relu_kernel(stats_ref, gamma_ref, beta_ref, y_ref, o_ref, *, inv_n):
    # stats_ref: (16, D) resident  (rows 0-7 sum partials, 8-15 sumsq partials)
    # gamma/beta: (1, D) resident
    # y_ref:     (TM2, D) bf16 projected activations
    # o_ref:     (TM2, D) f32 output
    ssum = jnp.sum(stats_ref[0:8, :], axis=0, keepdims=True)    # (1, D)
    ssq = jnp.sum(stats_ref[8:16, :], axis=0, keepdims=True)    # (1, D)
    mean = ssum * inv_n
    var = jnp.maximum(ssq * inv_n - mean * mean, 0.0)           # biased var
    inv_std = jax.lax.rsqrt(var + BN_EPS)                       # EUP
    scale = gamma_ref[...] * inv_std
    shift = beta_ref[...] - mean * scale
    y = y_ref[...].astype(jnp.float32)
    o_ref[...] = jnp.maximum(y * scale + shift, 0.0).astype(o_ref.dtype)


def concat_subsampler_forward(xs, xlens, params, factor, *,
                              tile_m=None, tile_m_bn=None):
    """Pallas implementation of ConcatSubsampler.forward.

    xs:    (B, T, D) float32
    xlens: (B,)      int32
    params: dict with 'w' (factor*D, D), 'b' (D,), 'gamma' (D,), 'beta' (D,)
    """
    if factor == 1:
        return xs, xlens

    B, T, D = xs.shape
    Tp = T // factor
    assert Tp >= 1, "sequence shorter than subsampling factor"
    F = factor * D
    N = B * Tp

    # Frame concatenation == reshape of the kept leading Tp*factor frames
    # (free when T % factor == 0).
    # TODO(synk): when T % factor != 0 this slice is an XLA copy; fold the
    # frame drop into pass 1's input DMA with a (B, Tp)-style index_map.
    x_flat = xs[:, : Tp * factor, :].reshape(N, F)

    w = params["w"].astype(jnp.bfloat16)                       # (F, D)
    gamma2 = params["gamma"].astype(jnp.float32).reshape(1, D)
    beta2 = params["beta"].astype(jnp.float32).reshape(1, D)
    # NOTE: the Linear bias is intentionally not applied: train-mode BatchNorm
    # subtracts the batch mean, so BN(Wx + b) == BN(Wx) exactly.

    vmem_cap = _vmem_capacity_bytes()
    budget = max(16 << 20, int(vmem_cap * 0.55))

    # ---------------- Pass 1: projection + sum / sumsq statistics -----------
    if tile_m is None:
        per_row1 = 2 * F * 4 + 2 * D * 2         # x f32 + y bf16, double-buffered
        fixed1 = 2 * F * D * 2 + 2 * 16 * D * 4 + (2 << 20)
        tile_m = _pick_tile(N, per_row1, fixed1, budget, cap=512)
    tm = _round_up(min(tile_m, _round_up(N, _SUBLANE)), _SUBLANE)
    n_tiles = pl.cdiv(N, tm)

    # Split the stats accumulation over S slices (leading "parallel" axis):
    # on v7x the two TensorCores each own one slice; on 1-TC chips it just
    # iterates.  Partial slices are summed in the wrapper.
    S = 2 if n_tiles >= 2 else 1
    Tc = pl.cdiv(n_tiles, S)
    mask_needed = (N % tm != 0) or (S * Tc != n_tiles)

    def row_block(i, j):
        # Clamp duplicated trailing tiles (when S*Tc > n_tiles) to the last
        # valid block: the re-write is idempotent and their stats are masked.
        return jnp.minimum(i * Tc + j, n_tiles - 1)

    need1 = (2 * tm * F * 4 + 2 * tm * D * 2 + 2 * F * D * 2
             + 2 * 16 * D * 4 + (2 << 20))
    vmem1 = int(min(max(need1 + (4 << 20), 32 << 20), int(vmem_cap * 0.9)))
    # TODO(synk): for very large factor*D on v7x (resident bf16 weight near
    # ~16-24 MiB), add a K grid axis over F with an f32 VMEM accumulator
    # instead of holding the full weight resident.

    y, stats = pl.pallas_call(
        functools.partial(_proj_stats_kernel, n_valid=N, tile_m=tm,
                          tiles_per_slice=Tc, mask_needed=mask_needed),
        grid=(S, Tc),
        in_specs=[
            pl.BlockSpec((tm, F), lambda i, j: (row_block(i, j), 0)),
            pl.BlockSpec((F, D), lambda i, j: (0, 0)),      # weight, resident
        ],
        out_specs=(
            pl.BlockSpec((tm, D), lambda i, j: (row_block(i, j), 0)),
            pl.BlockSpec((None, 16, D), lambda i, j: (i, 0, 0)),  # per-slice stats
        ),
        out_shape=(
            jax.ShapeDtypeStruct((N, D), jnp.bfloat16),      # bf16 intermediate
            jax.ShapeDtypeStruct((S, 16, D), jnp.float32),
        ),
        compiler_params=pltpu.CompilerParams(
            dimension_semantics=("parallel", "arbitrary"),
            vmem_limit_bytes=vmem1,
        ),
        cost_estimate=pl.CostEstimate(
            flops=2 * N * F * D,
            transcendentals=0,
            bytes_accessed=N * F * 4 + F * D * 2 + N * D * 2 + S * 16 * D * 4,
        ),
    )(x_flat, w)

    # Tiny cross-slice reduce (single fused XLA op); 8->1 sublane reduce and
    # the mean/var/rsqrt math happen inside pass 2.
    stats16 = stats.sum(axis=0)                              # (16, D)

    # ---------------- Pass 2: BatchNorm (batch stats) + ReLU ----------------
    if tile_m_bn is None:
        per_row2 = 2 * D * 2 + 2 * D * 4                     # y bf16 + out f32
        fixed2 = 2 * 18 * D * 4 + (2 << 20)
        tile_m_bn = _pick_tile(N, per_row2, fixed2, budget, cap=1024)
    tm2 = _round_up(min(tile_m_bn, _round_up(N, _SUBLANE)), _SUBLANE)
    n_tiles2 = pl.cdiv(N, tm2)
    need2 = 2 * tm2 * D * 2 + 2 * tm2 * D * 4 + 2 * 18 * D * 4 + (2 << 20)
    vmem2 = int(min(max(need2 + (4 << 20), 32 << 20), int(vmem_cap * 0.9)))

    out = pl.pallas_call(
        functools.partial(_bn_relu_kernel, inv_n=1.0 / N),
        grid=(n_tiles2,),
        in_specs=[
            pl.BlockSpec((16, D), lambda i: (0, 0)),         # stats, resident
            pl.BlockSpec((1, D), lambda i: (0, 0)),          # gamma, resident
            pl.BlockSpec((1, D), lambda i: (0, 0)),          # beta, resident
            pl.BlockSpec((tm2, D), lambda i: (i, 0)),        # y tile
        ],
        out_specs=pl.BlockSpec((tm2, D), lambda i: (i, 0)),
        out_shape=jax.ShapeDtypeStruct((N, D), jnp.float32),
        compiler_params=pltpu.CompilerParams(
            dimension_semantics=("parallel",),               # megacore-shardable
            vmem_limit_bytes=vmem2,
        ),
        cost_estimate=pl.CostEstimate(
            flops=3 * N * D,
            transcendentals=0,
            bytes_accessed=N * D * 2 + N * D * 4 + 18 * D * 4,
        ),
    )(stats16, gamma2, beta2, y)

    # No row/lane padding was added, so this reshape is free (no HBM copy).
    out = out.reshape(B, Tp, D)
    # Reference does `xlens /= factor` on integer lengths -> floor division.
    xlens_out = xlens // factor
    return out, xlens_out


def init_params(key, factor, n_units, n_dirs):
    """Parameter init matching the module's shapes.

    torch Linear(D*factor, D) -> weight (D, F), bias (D,); stored transposed
    here as w: (F, D).  BatchNorm1d(D): gamma = ones, beta = zeros.  The bias
    'b' is kept for interface parity (used by the reference) but is a no-op
    under train-mode BatchNorm, so the kernel drops it.
    """
    D = n_units * n_dirs
    F = D * factor
    kw, kb = jax.random.split(key)
    bound = 1.0 / jnp.sqrt(F)
    w = jax.random.uniform(kw, (F, D), jnp.float32, -bound, bound)
    b = jax.random.uniform(kb, (D,), jnp.float32, -bound, bound)
    gamma = jnp.ones((D,), jnp.float32)
    beta = jnp.zeros((D,), jnp.float32)
    return {"w": w, "b": b, "gamma": gamma, "beta": beta}


def _reference(xs, params, factor):
    """Pure-JAX reference following the PyTorch math (bias + f32 BatchNorm)."""
    B, T, D = xs.shape
    Tp = T // factor
    x = xs[:, : Tp * factor, :].reshape(B * Tp, factor * D)
    y = jnp.dot(x.astype(jnp.bfloat16), params["w"].astype(jnp.bfloat16),
                preferred_element_type=jnp.float32) + params["b"][None, :]
    mean = jnp.mean(y, axis=0, keepdims=True)
    var = jnp.mean((y - mean) ** 2, axis=0, keepdims=True)
    yn = (y - mean) * jax.lax.rsqrt(var + BN_EPS) * params["gamma"] + params["beta"]
    return jnp.maximum(yn, 0.0).reshape(B, Tp, D)


if __name__ == "__main__":
    factor = 2
    n_units = 16
    n_dirs = 2
    D = n_units * n_dirs       # 32
    B, T = 2, 8

    key = jax.random.PRNGKey(0)
    k_x, k_p = jax.random.split(key)
    xs = jax.random.normal(k_x, (B, T, D), dtype=jnp.float32)
    xlens = jnp.array([8, 6], dtype=jnp.int32)
    params = init_params(k_p, factor, n_units, n_dirs)

    out, out_lens = concat_subsampler_forward(xs, xlens, params, factor)
    out = jax.block_until_ready(out)
    out_lens = jax.block_until_ready(out_lens)

    assert out.shape == (B, T // factor, D), out.shape
    assert out_lens.shape == (B,), out_lens.shape

    ref = _reference(xs, params, factor)
    max_err = float(jnp.max(jnp.abs(out - ref)))
    assert max_err < 5e-2, max_err

    print("KERNEL_OK")
</pallas_src>

<mosaic_0001>
module attributes {stable_mosaic.version = 11 : i64} {
  func.func @_proj_stats_kernel(%arg0: i32, %arg1: i32, %arg2: memref<8x64xf32, #tpu.memory_space<vmem>>, %arg3: memref<64x32xbf16, #tpu.memory_space<vmem>>, %arg4: memref<8x32xbf16, #tpu.memory_space<vmem>>, %arg5: memref<1x16x32xf32, #tpu.memory_space<vmem>>) attributes {dimension_semantics = [#tpu.dimension_semantics<parallel>, #tpu.dimension_semantics<arbitrary>], iteration_bounds = array<i64: 1, 1>, scalar_prefetch = 0 : i64, scratch_operands = 0 : i64, tpu.core_type = #tpu.core_type<tc>, window_params = [{transform_indices = @transform_0, window_bounds = array<i64: 8, 64>}, {pipeline_mode = #tpu.pipeline_mode<synchronous>, transform_indices = @transform_1, window_bounds = array<i64: 64, 32>}, {transform_indices = @transform_2, window_bounds = array<i64: 8, 32>}, {transform_indices = @transform_3, window_bounds = array<i64: 1, 16, 32>}]} {
    %c0_i32 = arith.constant 0 : i32
    %0 = arith.cmpi eq, %arg1, %c0_i32 : i32
    %1 = arith.extui %0 : i1 to i32
    %c0_i32_0 = arith.constant 0 : i32
    %2 = arith.cmpi ne, %1, %c0_i32_0 : i32
    scf.if %2 {
      %cst_17 = arith.constant 0.000000e+00 : f32
      %22 = vector.broadcast %cst_17 : f32 to vector<16x32xf32>
      %c0_18 = arith.constant 0 : index
      %c0_19 = arith.constant 0 : index
      %c0_20 = arith.constant 0 : index
      %23 = vector.load %arg5[%c0_18, %c0_19, %c0_20] : memref<1x16x32xf32, #tpu.memory_space<vmem>>, vector<1x16x32xf32>
      %24 = vector.shape_cast %23 : vector<1x16x32xf32> to vector<16x32xf32>
      %25 = vector.shape_cast %22 : vector<16x32xf32> to vector<1x16x32xf32>
      tpu.vector_store %arg5[%c0_18, %c0_19, %c0_20], %25 {strides = array<i32>} : memref<1x16x32xf32, #tpu.memory_space<vmem>>, vector<1x16x32xf32>,
    } else {
    }
    %c0 = arith.constant 0 : index
    %c0_1 = arith.constant 0 : index
    %3 = vector.load %arg2[%c0, %c0_1] : memref<8x64xf32, #tpu.memory_space<vmem>>, vector<8x64xf32>
    %4 = arith.truncf %3 : vector<8x64xf32> to vector<8x64xbf16>
    %c0_2 = arith.constant 0 : index
    %c0_3 = arith.constant 0 : index
    %5 = vector.load %arg3[%c0_2, %c0_3] : memref<64x32xbf16, #tpu.memory_space<vmem>>, vector<64x32xbf16>
    %cst = arith.constant dense<0.000000e+00> : vector<8x32xf32>
    %6 = tpu.matmul %4, %5, %cst {dimension_numbers = #tpu.dot_dimension_numbers<[1], [0], [0], [1], [0, 0, 1, 1], [], []>} : vector<8x64xbf16>, vector<64x32xbf16>, vector<8x32xf32> -> vector<8x32xf32>
    %7 = arith.truncf %6 : vector<8x32xf32> to vector<8x32xbf16>
    %c0_4 = arith.constant 0 : index
    %c0_5 = arith.constant 0 : index
    %8 = vector.load %arg4[%c0_4, %c0_5] : memref<8x32xbf16, #tpu.memory_space<vmem>>, vector<8x32xbf16>
    tpu.vector_store %arg4[%c0_4, %c0_5], %7 {strides = array<i32>} : memref<8x32xbf16, #tpu.memory_space<vmem>>, vector<8x32xbf16>,
    %9 = arith.mulf %6, %6 : vector<8x32xf32>
    %c0_6 = arith.constant 0 : index
    %c0_7 = arith.constant 0 : index
    %c0_8 = arith.constant 0 : index
    %10 = vector.load %arg5[%c0_6, %c0_7, %c0_8] : memref<1x16x32xf32, #tpu.memory_space<vmem>>, vector<1x8x32xf32>
    %11 = vector.shape_cast %10 : vector<1x8x32xf32> to vector<8x32xf32>
    %12 = arith.addf %11, %6 : vector<8x32xf32>
    %c0_9 = arith.constant 0 : index
    %c0_10 = arith.constant 0 : index
    %c0_11 = arith.constant 0 : index
    %13 = vector.load %arg5[%c0_9, %c0_10, %c0_11] : memref<1x16x32xf32, #tpu.memory_space<vmem>>, vector<1x8x32xf32>
    %14 = vector.shape_cast %13 : vector<1x8x32xf32> to vector<8x32xf32>
    %15 = vector.shape_cast %12 : vector<8x32xf32> to vector<1x8x32xf32>
    tpu.vector_store %arg5[%c0_9, %c0_10, %c0_11], %15 {strides = array<i32>} : memref<1x16x32xf32, #tpu.memory_space<vmem>>, vector<1x8x32xf32>,
    %c0_12 = arith.constant 0 : index
    %c8 = arith.constant 8 : index
    %c0_13 = arith.constant 0 : index
    %16 = vector.load %arg5[%c0_12, %c8, %c0_13] : memref<1x16x32xf32, #tpu.memory_space<vmem>>, vector<1x8x32xf32>
    %17 = vector.shape_cast %16 : vector<1x8x32xf32> to vector<8x32xf32>
    %18 = arith.addf %17, %9 : vector<8x32xf32>
    %c0_14 = arith.constant 0 : index
    %c8_15 = arith.constant 8 : index
    %c0_16 = arith.constant 0 : index
    %19 = vector.load %arg5[%c0_14, %c8_15, %c0_16] : memref<1x16x32xf32, #tpu.memory_space<vmem>>, vector<1x8x32xf32>
    %20 = vector.shape_cast %19 : vector<1x8x32xf32> to vector<8x32xf32>
    %21 = vector.shape_cast %18 : vector<8x32xf32> to vector<1x8x32xf32>
    tpu.vector_store %arg5[%c0_14, %c8_15, %c0_16], %21 {strides = array<i32>} : memref<1x16x32xf32, #tpu.memory_space<vmem>>, vector<1x8x32xf32>,
    return
  }
  func.func @transform_0(%arg0: i32, %arg1: i32) -> (i32, i32) {
    %c1_i32 = arith.constant 1 : i32
    %0 = arith.muli %arg0, %c1_i32 : i32
    %1 = arith.addi %0, %arg1 : i32
    %c0_i32 = arith.constant 0 : i32
    %2 = arith.minsi %1, %c0_i32 : i32
    %c0_i32_0 = arith.constant 0 : i32
    %c0_i32_1 = arith.constant 0 : i32
    return %2, %c0_i32_0 : i32, i32
  }
  func.func @transform_1(%arg0: i32, %arg1: i32) -> (i32, i32) {
    %c0_i32 = arith.constant 0 : i32
    %c0_i32_0 = arith.constant 0 : i32
    %c0_i32_1 = arith.constant 0 : i32
    return %c0_i32, %c0_i32_0 : i32, i32
  }
  func.func @transform_2(%arg0: i32, %arg1: i32) -> (i32, i32) {
    %c1_i32 = arith.constant 1 : i32
    %0 = arith.muli %arg0, %c1_i32 : i32
    %1 = arith.addi %0, %arg1 : i32
    %c0_i32 = arith.constant 0 : i32
    %2 = arith.minsi %1, %c0_i32 : i32
    %c0_i32_0 = arith.constant 0 : i32
    %c0_i32_1 = arith.constant 0 : i32
    return %2, %c0_i32_0 : i32, i32
  }
  func.func @transform_3(%arg0: i32, %arg1: i32) -> (i32, i32, i32) {
    %c0_i32 = arith.constant 0 : i32
    %c0_i32_0 = arith.constant 0 : i32
    %c0_i32_1 = arith.constant 0 : i32
    return %arg0, %c0_i32, %c0_i32_0 : i32, i32, i32
  }
}

</mosaic_0001>

<llo_original>
// kernel: tpu_custom_call.1
$region0: #{tpu_custom_call.1}
  #allocation0 [shape = 'u32[]', space=smem, size = 0x4, offset = 0x4, fixed_abs, tag = 'smem constant byte address 0x4 - core index']
  #allocation1 [shape = 'u32[144,128]{1,0:T(1,128)}', space=vmem, size = 0x12000, scoped, tag = 'internal scratch']
  %s0 = inlined_call_operand.vmem [shape: f32[8,64], index: 0, kind: input, shape index: {}]
  %s1 = inlined_call_operand.vmem [shape: bf16[64,32], index: 1, kind: input, shape index: {}]
  %s2 = inlined_call_operand.hbm [shape: bf16[8,32], index: 2, kind: output, shape index: {0}]
  %s3 = inlined_call_operand.hbm [shape: f32[1,16,32], index: 3, kind: output, shape index: {1}]
  %4 = xla_tuple %s2, %s3
  %s5 = sld [smem:[#allocation0]]
  $region30: #{tpu_custom_call.1} parent=0
    _
  %s7 = ssub.s32 1, %s5
  %s8 = scalar_select 0, %s7, %s5
  $region1: #{tpu_custom_call.1} parent=0
    #allocation2 [shape = 'u8[2048]{0}', space=vmem, size = 0x800, scoped, tag = 'output window, operand 0, single buffered']
    #allocation3 [shape = 's32[1]{0}', space=sflag, size = 0x4, scoped, tag = 'scoped memory for tpu_custom_call.1']
    #allocation4 [shape = 'u8[8192]{0}', space=vmem, size = 0x2000, scoped, tag = 'output window, operand 1, single buffered']
    #allocation5 [shape = 's32[1]{0}', space=sflag, size = 0x4, scoped, tag = 'scoped memory for tpu_custom_call.1']
    %9 = vsyncpa [#allocation3], 0
    %10 = vsyncpa [#allocation5], 0
    // Predicated region
    $region2: #{tpu_custom_call.1} parent=1 // pred_check
      _
    $region3: #{tpu_custom_call.1} parent=1 // pred_check_branch
      %12 = sbr.rel (0) target = $region5
    $region4: #{tpu_custom_call.1} parent=1 // pred_region
      %s13 = sadd.s32 0, 0
      %p14 = scmp.lt.s32.totalorder %s13, 0
      %s15 = scalar_select %p14, %s13, 0
      %p16 = scmp.lt.s32.totalorder %s15, 0
      %s17 = scalar_select %p16, %s15, 0
      %s18 = smul.addr %s17, 8
      %s19 = scalar_lea.vmem %s0, %s18
      %s20 = sadd.s32 0, 0
      %p21 = scmp.lt.s32.totalorder %s20, 0
      %s22 = scalar_select %p21, %s20, 0
    $region5: #{tpu_custom_call.1} parent=1 // pred_fallthru
      _
    // Predicated region
    $region6: #{tpu_custom_call.1} parent=1 // pred_check
      _
    $region7: #{tpu_custom_call.1} parent=1 // pred_check_branch
      %24 = sbr.rel (0) target = $region9
    $region8: #{tpu_custom_call.1} parent=1 // pred_region
      _
    $region9: #{tpu_custom_call.1} parent=1 // pred_fallthru
      _
    %s25 = sadd.s32 0, 0
    %p26 = scmp.lt.s32.totalorder %s25, 0
    %s27 = scalar_select %p26, %s25, 0
    %p28 = scmp.lt.s32.totalorder %s27, 0
    %s29 = scalar_select %p28, %s27, 0
    %s30 = smul.addr %s29, 8
    %s31 = scalar_lea.vmem %s0, %s30
    %s32 = sadd.s32 0, 0
    %p33 = scmp.lt.s32.totalorder %s32, 0
    %s34 = scalar_select %p33, %s32, 0
    %p35 = scmp.lt.s32.totalorder %s34, 0
    %s36 = scalar_select %p35, %s34, 0
    %s37 = smul.addr %s36, 8
    %s38 = scalar_lea.vmem %s0, %s37
    %s39 = sadd.s32 0, 0
    %p40 = scmp.lt.s32.totalorder %s39, 0
    %s41 = scalar_select %p40, %s39, 0
    %s42 = sadd.s32 0, 0
    %p43 = scmp.lt.s32.totalorder %s42, 0
    %s44 = scalar_select %p43, %s42, 0
    %p46 = scmp.eq.s32.totalorder 0, 0
    // Predicated region
    $region10: #{tpu_custom_call.1} parent=1 // pred_check
      %p47 = pneg %p46
    $region11: #{tpu_custom_call.1} parent=1 // pred_check_branch
      %49 = sbr.rel (%p47) target = $region13
    $region12: #{tpu_custom_call.1} parent=1 // pred_region
      %vm50 = vcmask 261120
      %51 = vst.msk [vmem:[#allocation4] sm:$0xff] %vm50, 0.0
      %52 = vst.msk [vmem:[#allocation4 + $0x8] sm:$0xff] %vm50, 0.0
    $region13: #{tpu_custom_call.1} parent=1 // pred_fallthru
      _
    %v53 = vld [vmem:[%s38] sm:$0xff]
    %v54 = vpack.c.bf16 %v53, %v53
    %v55 = vld [vmem:[%s1] sm:$0xf]
    %v56 = vld [vmem:[%s1 + $0x4] sm:$0xf]
    %v57 = vld [vmem:[%s1 + $0x8] sm:$0xf]
    %v58 = vld [vmem:[%s1 + $0xc] sm:$0xf]
    %v59 = vld [vmem:[%s1 + $0x10] sm:$0xf]
    %v60 = vld [vmem:[%s1 + $0x14] sm:$0xf]
    %v61 = vld [vmem:[%s1 + $0x18] sm:$0xf]
    %v62 = vld [vmem:[%s1 + $0x1c] sm:$0xf]
    %v71 = vunpack.c.l.b16 %v55
    %v72 = vunpack.c.l.b16 %v56
    %v73 = vunpack.c.l.b16 %v57
    %v74 = vunpack.c.l.b16 %v58
    %v75 = vunpack.c.l.b16 %v59
    %v76 = vunpack.c.l.b16 %v60
    %v77 = vunpack.c.l.b16 %v61
    %v78 = vunpack.c.l.b16 %v62
    %v79 = vpack.c.b16 %v72, %v71
    %v80 = vpack.c.b16 %v74, %v73
    %v81 = vpack.c.b16 %v76, %v75
    %v82 = vpack.c.b16 %v78, %v77
    %vm87 = vcmask 523264
    %v89 = vsel %vm87, %v54, 0
    %91 = vmatprep.subr.bf16.mxu0 0
    %92 = vmatpush1.bf16.msra.mxu0 %v79
    %93 = vmatprep.subr.bf16.mxu0 0
    %94 = vmatpush1.bf16.msra.mxu0 %v80
    %95 = vmatprep.subr.bf16.mxu0 0
    %96 = vmatpush1.bf16.msra.mxu0 %v81
    %97 = vmatprep.subr.bf16.mxu0 0
    %98 = vmatpush1.bf16.msra.mxu0 %v82
    %99 = vmatprep.subr.bf16.mxu0 0
    %100 = vmatpush1.bf16.msra.mxu0 0
    %101 = vmatprep.subr.bf16.mxu0 0
    %102 = vmatpush1.bf16.msra.mxu0 0
    %103 = vmatprep.subr.bf16.mxu0 0
    %104 = vmatpush1.bf16.msra.mxu0 0
    %105 = vmatprep.subr.bf16.mxu0 0
    %106 = vmatpush1.bf16.msra.mxu0 0
    %107 = vmatprep.subr.bf16.mxu0 0
    %108 = vmatpush1.bf16.msra.mxu0 0
    %109 = vmatprep.subr.bf16.mxu0 0
    %110 = vmatpush1.bf16.msra.mxu0 0
    %111 = vmatprep.subr.bf16.mxu0 0
    %112 = vmatpush1.bf16.msra.mxu0 0
    %113 = vmatprep.subr.bf16.mxu0 0
    %114 = vmatpush1.bf16.msra.mxu0 0
    %115 = vmatprep.subr.bf16.mxu0 0
    %116 = vmatpush1.bf16.msra.mxu0 0
    %117 = vmatprep.subr.bf16.mxu0 0
    %118 = vmatpush1.bf16.msra.mxu0 0
    %119 = vmatprep.subr.bf16.mxu0 0
    %120 = vmatpush1.bf16.msra.mxu0 0
    %121 = vmatprep.subr.bf16.mxu0 0
    %122 = vmatpush1.bf16.msra.mxu0 0
    %123 = vmatprep.mubr.bf16.mxu0 0
    %124 = vmatmul.mubr.bf16.gmra.mrb[0].mxu0 %v89
    %v125 = vpop.f32.mrb[0].mxu0
    %v126 = vadd.f32 0.0, %v125
    %v127 = vpop.f32.mrb[0].mxu0
    %v128 = vpop.f32.mrb[0].mxu0
    %v129 = vpop.f32.mrb[0].mxu0
    %130 = vdwg.mxu0
    %v131 = vpack.c.bf16 %v126, %v126
    %vm132 = vcmask 257024
    %133 = vst.msk [vmem:[#allocation2] sm:$0xf] %vm132, %v131
    %v134 = vmul.f32 %v126, %v126
    %v135 = vld [vmem:[#allocation4] sm:$0xff]
    %v136 = vadd.f32 %v135, %v126
    %vm137 = vcmask 261120
    %138 = vst.msk [vmem:[#allocation4] sm:$0xff] %vm137, %v136
    %v139 = vld [vmem:[#allocation4 + $0x8] sm:$0xff]
    %v140 = vadd.f32 %v139, %v134
    %141 = vst.msk [vmem:[#allocation4 + $0x8] sm:$0xff] %vm137, %v140
    // Predicated region
    $region14: #{tpu_custom_call.1} parent=1 // pred_check
      _
    $region15: #{tpu_custom_call.1} parent=1 // pred_check_branch
      %143 = sbr.rel (0) target = $region17
    $region16: #{tpu_custom_call.1} parent=1 // pred_region
      %s144 = sadd.s32 0, 0
      %p145 = scmp.lt.s32.totalorder %s144, 0
      %s146 = scalar_select %p145, %s144, 0
      %s148 = ssub.s32 64, 64
      %149 = vsyncadd [#allocation3], %s148
      %s150 = smul.addr %s146, 64
      %s151 = scalar_lea.hbm %s2, %s150
      %s153 = sshll.u32 [#allocation2], 4
      %s154 = int_to_ptr.vmem [resolvable:$true] %s153
      %156 = dma.vmem_to_hbm [thread:$0]  %s154, 64, %s151, [#allocation3]
    $region17: #{tpu_custom_call.1} parent=1 // pred_fallthru
      _
    // Predicated region
    $region18: #{tpu_custom_call.1} parent=1 // pred_check
      _
    $region19: #{tpu_custom_call.1} parent=1 // pred_check_branch
      %158 = sbr.rel (0) target = $region21
    $region20: #{tpu_custom_call.1} parent=1 // pred_region
      %s160 = ssub.s32 256, 256
      %161 = vsyncadd [#allocation5], %s160
      %s162 = sshll.u32 [#allocation4], 4
      %s163 = int_to_ptr.vmem [resolvable:$true] %s162
      %168 = dma.vmem_to_hbm [thread:$0]  %s163, 256, %s3, [#allocation5], 128, 128, 8
    $region21: #{tpu_custom_call.1} parent=1 // pred_fallthru
      _
    // Predicated region
    $region22: #{tpu_custom_call.1} parent=1 // pred_check
      _
    $region23: #{tpu_custom_call.1} parent=1 // pred_check_branch
      %170 = sbr.rel (0) target = $region25
    $region24: #{tpu_custom_call.1} parent=1 // pred_region
      %171 = dma.done [#allocation3], 64
    $region25: #{tpu_custom_call.1} parent=1 // pred_fallthru
      _
    // Predicated region
    $region26: #{tpu_custom_call.1} parent=1 // pred_check
      _
    $region27: #{tpu_custom_call.1} parent=1 // pred_check_branch
      %173 = sbr.rel (0) target = $region29
    $region28: #{tpu_custom_call.1} parent=1 // pred_region
      %174 = dma.done [#allocation5], 256
    $region29: #{tpu_custom_call.1} parent=1 // pred_fallthru
      _
    %175 = vsyncpa [#allocation3], 1
    %176 = vsyncpa [#allocation5], 1

</llo_original>
